<compile_context>
chip_gen: v6e
topology: v6e:2x2x1
jax: 0.10.0
libtpu: 0.0.40
codegen_flags: <defaults>
</compile_context>

<pallas_src>
from typing import NamedTuple, Optional

import jax
import jax.numpy as jnp
import numpy as np
from jax.experimental import pallas as pl
from jax.experimental.pallas import tpu as pltpu


def _round_up(n: int, m: int) -> int:
    return ((n + m - 1) // m) * m


# ------------------------------ Pallas kernels ------------------------------ #
def _dg_mean_kernel(x_ref, w_ref, b_ref, mean_ref):
    # (tm, Din) @ (Din, Dout) on the MXU, f32 accumulation.
    acc = jnp.dot(x_ref[...], w_ref[...], preferred_element_type=jnp.float32)
    mean_ref[...] = (acc + b_ref[...]).astype(mean_ref.dtype)


def _dg_mean_masked_kernel(x_ref, w_ref, b_ref, avail_ref, mean_ref):
    acc = jnp.dot(x_ref[...], w_ref[...], preferred_element_type=jnp.float32)
    avail = avail_ref[...].astype(jnp.float32)     # keep elementwise math in f32 (v5e)
    mean_ref[...] = ((acc + b_ref[...]) * avail).astype(mean_ref.dtype)


# ------------------------------- Wrapper ------------------------------------ #
def _choose_block_rows(B: int, block_rows: int) -> int:
    """Batch tile: multiple of 8 (or == B when B <= 8); >=2 grid steps when
    B > 8 so v7x's two TensorCores both get work."""
    if B <= 8:
        return B                                   # full-dim escape on tiny batch
    tm = _round_up(min(block_rows, B), 8)
    if pl.cdiv(B, tm) < 2:
        tm = max(8, _round_up(pl.cdiv(B, 2), 8))   # split batch across 2 TCs (v7x)
    return tm


def diag_gaussian_mean(x, w_t, b, available_actions=None, *, block_rows=1024):
    """action_mean = x @ w_t + b  (optionally * available_actions) via Pallas.

    x:   (B, Din)      read as-is (no wrapper cast / pad / slice)
    w_t: (Din, Dout)   pre-transposed Linear weight
    b:   (1, Dout)     bias row
    available_actions: optional (B, Dout) mask (any numeric dtype, unpadded)
    returns (B, Dout) f32 action_mean.
    """
    B, Din = x.shape
    Dout = w_t.shape[1]

    tm = _choose_block_rows(B, block_rows)
    grid = (pl.cdiv(B, tm),)                       # partial trailing block allowed

    if w_t.dtype != x.dtype:                       # tiny (Din, Dout) cast only
        w_t = w_t.astype(x.dtype)

    x_spec = pl.BlockSpec((tm, Din), lambda i: (i, 0))
    w_spec = pl.BlockSpec((Din, Dout), lambda i: (0, 0))   # grid-invariant (resident)
    b_spec = pl.BlockSpec((1, Dout), lambda i: (0, 0))     # grid-invariant (resident)
    out_spec = pl.BlockSpec((tm, Dout), lambda i: (i, 0))  # true-Dout (unpadded) store

    out_shape = jax.ShapeDtypeStruct((B, Dout), jnp.float32)
    cparams = pltpu.CompilerParams(dimension_semantics=("parallel",))

    if available_actions is None:
        return pl.pallas_call(
            _dg_mean_kernel,
            out_shape=out_shape,
            grid_spec=pltpu.PrefetchScalarGridSpec(
                num_scalar_prefetch=0, grid=grid,
                in_specs=[x_spec, w_spec, b_spec],
                out_specs=out_spec),
            compiler_params=cparams,
        )(x, w_t, b)

    avail_spec = pl.BlockSpec((tm, Dout), lambda i: (i, 0))   # unpadded mask stream
    return pl.pallas_call(
        _dg_mean_masked_kernel,
        out_shape=out_shape,
        grid_spec=pltpu.PrefetchScalarGridSpec(
            num_scalar_prefetch=0, grid=grid,
            in_specs=[x_spec, w_spec, b_spec, avail_spec],
            out_specs=out_spec),
        compiler_params=cparams,
    )(x, w_t, b, available_actions)


# ----------------------- FixedNormal-like container ------------------------- #
class FixedNormal(NamedTuple):
    mean: jnp.ndarray
    stddev: jnp.ndarray            # (B, Dout) or broadcastable (Dout,)
    action_scale: jnp.ndarray
    action_bias: jnp.ndarray
    mask: Optional[jnp.ndarray] = None

    def mode(self):
        return self.mean

    def entropy(self):
        ents = 0.5 + 0.5 * jnp.log(2.0 * jnp.pi) + jnp.log(self.stddev)
        ents = jnp.broadcast_to(ents, self.mean.shape)
        if self.mask is not None:
            ents = ents * self.mask
        return ents.sum(-1)

    # TODO(synk): sample()/log_probs() (tanh-squashed rsample + atanh log-prob)
    # are plain-JAX distribution math, not kernelized here.


# ------------------------------ Parameters ---------------------------------- #
class DiagGaussianParams(NamedTuple):
    wt: jnp.ndarray            # (num_inputs, num_outputs) pre-transposed Linear W
    b_mean: jnp.ndarray        # (1, num_outputs) kernel-ready bias row
    logstd_bias: jnp.ndarray   # (num_outputs,)  AddBias parameter
    exp_logstd: jnp.ndarray    # (num_outputs,)  precomputed exp(logstd) (hoisted)
    action_scale: jnp.ndarray  # scalar (action_space=None)
    action_bias: jnp.ndarray   # scalar


def orthogonal_init(key, rows, cols, gain):
    flat = jax.random.normal(key, (max(rows, cols), min(rows, cols)), jnp.float32)
    q, r = jnp.linalg.qr(flat)
    q = q * jnp.sign(jnp.diagonal(r))
    if rows < cols:
        q = q.T
    return gain * q[:rows, :cols]


def init_diag_gaussian(key, num_inputs, num_outputs, gain=0.01):
    w = orthogonal_init(key, num_outputs, num_inputs, gain)   # PyTorch (out, in)
    logstd = jnp.zeros((num_outputs,), jnp.float32)
    return DiagGaussianParams(
        wt=w.T,                                               # stored pre-transposed
        b_mean=jnp.zeros((1, num_outputs), jnp.float32),
        logstd_bias=logstd,
        exp_logstd=jnp.exp(logstd),
        action_scale=jnp.float32(1.0),
        action_bias=jnp.float32(0.0))


def set_logstd(params: DiagGaussianParams, logstd) -> DiagGaussianParams:
    """Update logstd and keep the hoisted exp(logstd) operand in sync."""
    logstd = jnp.asarray(logstd, jnp.float32)
    return params._replace(logstd_bias=logstd, exp_logstd=jnp.exp(logstd))


def diag_gaussian_apply(params: DiagGaussianParams, x, available_actions=None, *,
                        block_rows=1024):
    mean = diag_gaussian_mean(x, params.wt, params.b_mean, available_actions,
                              block_rows=block_rows)
    if available_actions is None:
        # std is x-independent: keep it as a (Dout,) vector (broadcasts lazily);
        # no per-batch std HBM writeback at all.
        std = params.exp_logstd
    else:
        # Exact PyTorch semantics exp(logstd * avail): tiny fused XLA elementwise
        # on the unpadded mask (correct even for non-binary masks).
        avail = jnp.asarray(available_actions, jnp.float32)
        std = jnp.exp(params.logstd_bias[None, :] * avail)
    return FixedNormal(mean=mean, stddev=std,
                       action_scale=params.action_scale,
                       action_bias=params.action_bias,
                       mask=None)


# --------------------------------- main -------------------------------------- #
if __name__ == "__main__":
    key = jax.random.PRNGKey(0)
    kp, kl, kx1, kx2, km2, kx3 = jax.random.split(key, 6)

    num_inputs, num_outputs = 32, 8
    params = init_diag_gaussian(kp, num_inputs, num_outputs, gain=0.01)
    # Give logstd a non-trivial (trained-looking) value so std isn't all-ones.
    params = set_logstd(params, 0.1 * jax.random.normal(kl, (num_outputs,), jnp.float32))

    def ref_forward(x, avail=None):
        m = x @ params.wt + params.b_mean
        if avail is None:
            return m, jnp.broadcast_to(jnp.exp(params.logstd_bias), m.shape)
        return m * avail, jnp.exp(jnp.broadcast_to(params.logstd_bias, m.shape) * avail)

    # --- 1) unmasked path, tiny batch (full-dim escape, single grid step) ---
    B1 = 4
    x1 = jax.random.normal(kx1, (B1, num_inputs), jnp.float32)
    dist1 = diag_gaussian_apply(params, x1, None)
    jax.block_until_ready((dist1.mean, dist1.stddev))
    rm1, rs1 = ref_forward(x1)
    assert np.allclose(dist1.mean, rm1, atol=1e-4, rtol=1e-4)
    assert np.allclose(jnp.broadcast_to(dist1.stddev, rm1.shape), rs1, atol=1e-5, rtol=1e-5)

    # --- 2) masked path, ragged batch: multi-step grid + partial trailing block ---
    B2 = 20
    x2 = jax.random.normal(kx2, (B2, num_inputs), jnp.float32)
    avail2 = (jax.random.uniform(km2, (B2, num_outputs)) > 0.3).astype(jnp.float32)
    dist2 = diag_gaussian_apply(params, x2, avail2, block_rows=8)
    jax.block_until_ready((dist2.mean, dist2.stddev))
    rm2, rs2 = ref_forward(x2, avail2)
    assert np.allclose(dist2.mean, rm2, atol=1e-4, rtol=1e-4)
    assert np.allclose(dist2.stddev, rs2, atol=1e-5, rtol=1e-5)

    # --- 3) unmasked, B=32: tm capped to 16 so grid=(2,) (v7x 2-TC split path) ---
    B3 = 32
    x3 = jax.random.normal(kx3, (B3, num_inputs), jnp.float32)
    dist3 = diag_gaussian_apply(params, x3, None)
    jax.block_until_ready((dist3.mean, dist3.stddev))
    rm3, rs3 = ref_forward(x3)
    assert np.allclose(dist3.mean, rm3, atol=1e-4, rtol=1e-4)
    assert np.allclose(jnp.broadcast_to(dist3.stddev, rm3.shape), rs3, atol=1e-5, rtol=1e-5)

    # Entropy smoke test (plain-JAX container math).
    jax.block_until_ready(dist2.entropy())

    print("KERNEL_OK")
</pallas_src>

<mosaic_0001>
module attributes {stable_mosaic.version = 11 : i64} {
  func.func @_dg_mean_kernel(%arg0: i32, %arg1: memref<4x32xf32, #tpu.memory_space<vmem>>, %arg2: memref<32x8xf32, #tpu.memory_space<vmem>>, %arg3: memref<1x8xf32, #tpu.memory_space<vmem>>, %arg4: memref<4x8xf32, #tpu.memory_space<vmem>>) attributes {dimension_semantics = [#tpu.dimension_semantics<parallel>], iteration_bounds = array<i64: 1>, scalar_prefetch = 0 : i64, scratch_operands = 0 : i64, tpu.core_type = #tpu.core_type<tc>, window_params = [{transform_indices = @transform_0, window_bounds = array<i64: 4, 32>}, {pipeline_mode = #tpu.pipeline_mode<synchronous>, transform_indices = @transform_1, window_bounds = array<i64: 32, 8>}, {pipeline_mode = #tpu.pipeline_mode<synchronous>, transform_indices = @transform_2, window_bounds = array<i64: 1, 8>}, {transform_indices = @transform_3, window_bounds = array<i64: 4, 8>}]} {
    %c0 = arith.constant 0 : index
    %c0_0 = arith.constant 0 : index
    %0 = vector.load %arg1[%c0, %c0_0] : memref<4x32xf32, #tpu.memory_space<vmem>>, vector<4x32xf32>
    %c0_1 = arith.constant 0 : index
    %c0_2 = arith.constant 0 : index
    %1 = vector.load %arg2[%c0_1, %c0_2] : memref<32x8xf32, #tpu.memory_space<vmem>>, vector<32x8xf32>
    %cst = arith.constant dense<0.000000e+00> : vector<4x8xf32>
    %2 = tpu.matmul %0, %1, %cst {dimension_numbers = #tpu.dot_dimension_numbers<[1], [0], [0], [1], [0, 0, 1, 1], [], []>} : vector<4x32xf32>, vector<32x8xf32>, vector<4x8xf32> -> vector<4x8xf32>
    %c0_3 = arith.constant 0 : index
    %c0_4 = arith.constant 0 : index
    %3 = vector.load %arg3[%c0_3, %c0_4] : memref<1x8xf32, #tpu.memory_space<vmem>>, vector<1x8xf32>
    %4 = vector.broadcast %3 : vector<1x8xf32> to vector<4x8xf32>
    %5 = arith.addf %2, %4 : vector<4x8xf32>
    %c0_5 = arith.constant 0 : index
    %c0_6 = arith.constant 0 : index
    %6 = vector.load %arg4[%c0_5, %c0_6] : memref<4x8xf32, #tpu.memory_space<vmem>>, vector<4x8xf32>
    tpu.vector_store %arg4[%c0_5, %c0_6], %5 {strides = array<i32>} : memref<4x8xf32, #tpu.memory_space<vmem>>, vector<4x8xf32>,
    return
  }
  func.func @transform_0(%arg0: i32) -> (i32, i32) {
    %c0_i32 = arith.constant 0 : i32
    %c0_i32_0 = arith.constant 0 : i32
    return %arg0, %c0_i32 : i32, i32
  }
  func.func @transform_1(%arg0: i32) -> (i32, i32) {
    %c0_i32 = arith.constant 0 : i32
    %c0_i32_0 = arith.constant 0 : i32
    %c0_i32_1 = arith.constant 0 : i32
    return %c0_i32, %c0_i32_0 : i32, i32
  }
  func.func @transform_2(%arg0: i32) -> (i32, i32) {
    %c0_i32 = arith.constant 0 : i32
    %c0_i32_0 = arith.constant 0 : i32
    %c0_i32_1 = arith.constant 0 : i32
    return %c0_i32, %c0_i32_0 : i32, i32
  }
  func.func @transform_3(%arg0: i32) -> (i32, i32) {
    %c0_i32 = arith.constant 0 : i32
    %c0_i32_0 = arith.constant 0 : i32
    return %arg0, %c0_i32 : i32, i32
  }
}

</mosaic_0001>

<llo_original>
// kernel: tpu_custom_call.1
$region0: #{tpu_custom_call.1}
  #allocation0 [shape = 'u32[]', space=smem, size = 0x4, offset = 0x4, fixed_abs, tag = 'smem constant byte address 0x4 - core index']
  #allocation1 [shape = 'u32[144,128]{1,0:T(1,128)}', space=vmem, size = 0x12000, scoped, tag = 'internal scratch']
  %s0 = inlined_call_operand.vmem [shape: f32[4,32], index: 0, kind: input, shape index: {}]
  %s1 = inlined_call_operand.vmem [shape: f32[32,8], index: 1, kind: input, shape index: {}]
  %s2 = inlined_call_operand.vmem [shape: f32[1,8], index: 2, kind: input, shape index: {}]
  %s3 = inlined_call_operand.hbm [shape: f32[4,8], index: 3, kind: output, shape index: {}]
  %s4 = sld [smem:[#allocation0]]
  $region22: #{tpu_custom_call.1} parent=0
    _
  %s6 = ssub.s32 1, %s4
  %s7 = scalar_select 0, %s6, %s4
  $region1: #{tpu_custom_call.1} parent=0
    #allocation2 [shape = 'u8[2048]{0}', space=vmem, size = 0x800, scoped, tag = 'output window, operand 0, single buffered']
    #allocation3 [shape = 's32[1]{0}', space=sflag, size = 0x4, scoped, tag = 'scoped memory for tpu_custom_call.1']
    %8 = vsyncpa [#allocation3], 0
    // Predicated region
    $region2: #{tpu_custom_call.1} parent=1 // pred_check
      _
    $region3: #{tpu_custom_call.1} parent=1 // pred_check_branch
      %10 = sbr.rel (0) target = $region5
    $region4: #{tpu_custom_call.1} parent=1 // pred_region
      _
    $region5: #{tpu_custom_call.1} parent=1 // pred_fallthru
      _
    // Predicated region
    $region6: #{tpu_custom_call.1} parent=1 // pred_check
      _
    $region7: #{tpu_custom_call.1} parent=1 // pred_check_branch
      %12 = sbr.rel (0) target = $region9
    $region8: #{tpu_custom_call.1} parent=1 // pred_region
      _
    $region9: #{tpu_custom_call.1} parent=1 // pred_fallthru
      _
    // Predicated region
    $region10: #{tpu_custom_call.1} parent=1 // pred_check
      _
    $region11: #{tpu_custom_call.1} parent=1 // pred_check_branch
      %14 = sbr.rel (0) target = $region13
    $region12: #{tpu_custom_call.1} parent=1 // pred_region
      _
    $region13: #{tpu_custom_call.1} parent=1 // pred_fallthru
      _
    %v15 = vld [vmem:[%s0] sm:$0xf]
    %v16 = vld [vmem:[%s1] sm:$0xff]
    %v17 = vld [vmem:[%s1 + $0x8] sm:$0xff]
    %v18 = vld [vmem:[%s1 + $0x10] sm:$0xff]
    %v19 = vld [vmem:[%s1 + $0x18] sm:$0xff]
    %v20 = vld [vmem:[%s2] sm:$0x1]
    %v22 = vlaneseq
    %v23 = vshrl.u32 %v22, 7
    %v24 = vsub.s32 0, %v23
    %v25 = vrot.slane %v20, %v24
    %vm27 = vcmask 261120
    %v29 = vsel %vm27, %v15, 0
    %31 = vmatprep.subr.mxu0 0.0
    %32 = vmatpush1.msra.mxu0 0.0
    %33 = vmatprep.subr.mxu0 0.0
    %34 = vmatpush1.msra.mxu0 0.0
    %35 = vmatprep.subr.mxu0 0.0
    %36 = vmatpush1.msra.mxu0 0.0
    %37 = vmatprep.subr.mxu0 0.0
    %38 = vmatpush1.msra.mxu0 0.0
    %39 = vmatprep.subr.mxu0 0.0
    %40 = vmatpush1.msra.mxu0 0.0
    %41 = vmatprep.subr.mxu0 0.0
    %42 = vmatpush1.msra.mxu0 0.0
    %43 = vmatprep.subr.mxu0 0.0
    %44 = vmatpush1.msra.mxu0 0.0
    %45 = vmatprep.subr.mxu0 0.0
    %46 = vmatpush1.msra.mxu0 0.0
    %47 = vmatprep.subr.mxu0 0.0
    %48 = vmatpush1.msra.mxu0 0.0
    %49 = vmatprep.subr.mxu0 0.0
    %50 = vmatpush1.msra.mxu0 0.0
    %51 = vmatprep.subr.mxu0 0.0
    %52 = vmatpush1.msra.mxu0 0.0
    %53 = vmatprep.subr.mxu0 0.0
    %54 = vmatpush1.msra.mxu0 0.0
    %55 = vmatprep.subr.mxu0 0.0
    %56 = vmatpush1.msra.mxu0 %v19
    %57 = vmatprep.subr.mxu0 0.0
    %58 = vmatpush1.msra.mxu0 %v18
    %59 = vmatprep.subr.mxu0 0.0
    %60 = vmatpush1.msra.mxu0 %v17
    %61 = vmatprep.subr.mxu0 0.0
    %62 = vmatpush1.msra.mxu0 %v16
    %63 = vmatprep.subr.mxu0 0.0
    %64 = vmatpush2.msra.mxu0 0.0
    %65 = vmatprep.subr.mxu0 0.0
    %66 = vmatpush2.msra.mxu0 0.0
    %67 = vmatprep.subr.mxu0 0.0
    %68 = vmatpush2.msra.mxu0 0.0
    %69 = vmatprep.subr.mxu0 0.0
    %70 = vmatpush2.msra.mxu0 0.0
    %71 = vmatprep.subr.mxu0 0.0
    %72 = vmatpush2.msra.mxu0 0.0
    %73 = vmatprep.subr.mxu0 0.0
    %74 = vmatpush2.msra.mxu0 0.0
    %75 = vmatprep.subr.mxu0 0.0
    %76 = vmatpush2.msra.mxu0 0.0
    %77 = vmatprep.subr.mxu0 0.0
    %78 = vmatpush2.msra.mxu0 0.0
    %79 = vmatprep.subr.mxu0 0.0
    %80 = vmatpush2.msra.mxu0 0.0
    %81 = vmatprep.subr.mxu0 0.0
    %82 = vmatpush2.msra.mxu0 0.0
    %83 = vmatprep.subr.mxu0 0.0
    %84 = vmatpush2.msra.mxu0 0.0
    %85 = vmatprep.subr.mxu0 0.0
    %86 = vmatpush2.msra.mxu0 0.0
    %87 = vmatprep.subr.mxu0 0.0
    %88 = vmatpush2.msra.mxu0 0.0
    %89 = vmatprep.subr.mxu0 0.0
    %90 = vmatpush2.msra.mxu0 0.0
    %91 = vmatprep.subr.mxu0 0.0
    %92 = vmatpush2.msra.mxu0 0.0
    %93 = vmatprep.subr.mxu0 0.0
    %94 = vmatpush2.msra.mxu0 0.0
    %95 = vmatprep.mubr.f32.mxu0 0.0
    %96 = vmatmul.mubr.f32.gmra.mxu0 %v29
    %v97 = vpop.f32.mrf.mxu0
    %v98 = vadd.f32 %v25, %v97
    %v99 = vpop.f32.mrf.mxu0
    %100 = vdwg.mxu0
    %vm101 = vcmask 60416
    %102 = vst.msk [vmem:[#allocation2] sm:$0xf] %vm101, %v98
    // Predicated region
    $region14: #{tpu_custom_call.1} parent=1 // pred_check
      _
    $region15: #{tpu_custom_call.1} parent=1 // pred_check_branch
      %104 = sbr.rel (0) target = $region17
    $region16: #{tpu_custom_call.1} parent=1 // pred_region
      %s106 = ssub.s32 64, 64
      %107 = vsyncadd [#allocation3], %s106
      %s109 = sshll.u32 [#allocation2], 4
      %s110 = int_to_ptr.vmem [resolvable:$true] %s109
      %112 = dma.vmem_to_hbm [thread:$0]  %s110, 64, %s3, [#allocation3]
    $region17: #{tpu_custom_call.1} parent=1 // pred_fallthru
      _
    // Predicated region
    $region18: #{tpu_custom_call.1} parent=1 // pred_check
      _
    $region19: #{tpu_custom_call.1} parent=1 // pred_check_branch
      %114 = sbr.rel (0) target = $region21
    $region20: #{tpu_custom_call.1} parent=1 // pred_region
      %115 = dma.done [#allocation3], 64
    $region21: #{tpu_custom_call.1} parent=1 // pred_fallthru
      _
    %116 = vsyncpa [#allocation3], 1

</llo_original>
